<compile_context>
chip_gen: v6e
topology: v6e:2x2x1
jax: 0.10.0
libtpu: 0.0.40
codegen_flags: <defaults>
</compile_context>

<pallas_src>
import jax
import jax.numpy as jnp
from jax.experimental import pallas as pl
from jax.experimental.pallas import tpu as pltpu


def _ffn_encoder_layer_kernel(x_ref, g_ref, b_ref, w1_ref, b1_ref, w2_ref,
                              b2_ref, o_ref, xn_ref, acc_ref):
    f = pl.program_id(1)

    @pl.when(f == 0)
    def _():
        # LayerNorm over the channel (last) axis, eps = 1e-5, computed once per
        # token tile and stashed in scratch for all F-chunks.
        xf = x_ref[...].astype(jnp.float32)
        mean = jnp.mean(xf, axis=-1, keepdims=True)
        cent = xf - mean
        var = jnp.mean(cent * cent, axis=-1, keepdims=True)
        xn = cent * jax.lax.rsqrt(var + 1e-5) * g_ref[...] + b_ref[...]
        xn_ref[...] = xn.astype(xn_ref.dtype)
        acc_ref[...] = jnp.zeros_like(acc_ref)

    # FFN chunk: fc1 (this F-chunk) -> relu -> fc2 (this F-chunk), f32 accumulate.
    h = jnp.dot(xn_ref[...], w1_ref[...],
                preferred_element_type=jnp.float32) + b1_ref[...]
    h = jnp.maximum(h, 0.0)
    acc_ref[...] += jnp.dot(h.astype(w2_ref.dtype), w2_ref[...],
                            preferred_element_type=jnp.float32)

    @pl.when(f == pl.num_programs(1) - 1)
    def _():
        # Residual re-reads x_ref (resident VMEM) instead of keeping a long-lived
        # f32 copy across both matmuls.
        y = acc_ref[...] + b2_ref[...]
        o_ref[...] = (x_ref[...].astype(jnp.float32) + y).astype(o_ref.dtype)


def _round_up(n, m):
    return ((n + m - 1) // m) * m


def _vmem_budget_bytes():
    # Per-generation VMEM budget (~85% of capacity): ~109 MiB on v5e/v6e,
    # ~54 MiB on v7x. Conservative 64 MiB fallback if the query is unavailable.
    try:
        cap = pltpu.get_tpu_info().vmem_capacity_bytes
    except Exception:
        cap = 64 * 1024 * 1024
    return int(cap * 0.85)


def _footprint_bytes(tile, C, F, tf, n_chunks, x_item, w_item):
    w_buf = 1 if n_chunks == 1 else 2          # constant blocks single-buffered
    fp = 0
    fp += 2 * tile * C * x_item                # x tile (double buffered)
    fp += 2 * tile * C * x_item                # out tile (double buffered)
    fp += w_buf * (C * tf + tf * C) * w_item   # w1 / w2 chunks
    fp += w_buf * tf * 4                       # b1 chunk (f32)
    fp += 3 * C * 4                            # gamma / beta / b2 (f32)
    fp += tile * C * w_item                    # xn scratch
    fp += tile * C * 4                         # f32 accumulator scratch
    fp += tile * tf * 4                        # hidden activation (f32)
    fp += 2 * tile * C * 4                     # f32 temporaries headroom
    return fp


def _choose_tiling(n_tok, C, F, x_item, w_item, budget, token_tile):
    tile = max(8, min(_round_up(token_tile, 8), _round_up(n_tok, 8)))
    # F-chunk candidates: full F first, then multiples of 128 that divide F
    # (divisibility required so no garbage-padded w1 columns / w2 rows leak
    # into the accumulator).
    f_cands = [F] + [tf for tf in range((F // 128) * 128, 0, -128)
                     if tf != F and F % tf == 0]
    while True:
        for tf in f_cands:
            n_chunks = pl.cdiv(F, tf)
            if _footprint_bytes(tile, C, F, tf, n_chunks, x_item, w_item) <= budget:
                return tile, tf, n_chunks
        if tile <= 8:
            tf = f_cands[-1]
            return tile, tf, pl.cdiv(F, tf)
        tile = max(8, _round_up(tile // 2, 8))


def ffn_encoder_layer(x, gamma, beta, w1, b1, w2, b2, *, token_tile=512,
                      weight_dtype=None, force_f_chunk=None):
    """x: (T, B, C). Weights: w1 (C, F), w2 (F, C). Returns (out, None)."""
    T, B, C = x.shape
    F = w1.shape[1]
    n_tok = T * B

    # Optional one-time weight cast (e.g. bf16) done in the wrapper; the kernel
    # always feeds the MXU in the weights' native dtype with f32 accumulation.
    if weight_dtype is not None:
        w1 = w1.astype(weight_dtype)
        w2 = w2.astype(weight_dtype)
    w_dtype = w1.dtype

    # Hoist constant casts/reshapes out of the kernel body.
    g2 = gamma.astype(jnp.float32).reshape(1, C)
    be2 = beta.astype(jnp.float32).reshape(1, C)
    b1_2 = b1.astype(jnp.float32).reshape(1, F)
    b2_2 = b2.astype(jnp.float32).reshape(1, C)

    x_item = jnp.dtype(x.dtype).itemsize
    w_item = jnp.dtype(w_dtype).itemsize
    budget = _vmem_budget_bytes()

    if force_f_chunk is not None:
        assert F % force_f_chunk == 0, "force_f_chunk must divide F"
        tf = int(force_f_chunk)
        nf = F // tf
        tile = max(8, min(_round_up(token_tile, 8), _round_up(n_tok, 8)))
    else:
        tile, tf, nf = _choose_tiling(n_tok, C, F, x_item, w_item, budget,
                                      token_tile)

    n_t_tiles = pl.cdiv(n_tok, tile)
    grid = (n_t_tiles, nf)

    # No padding / no output slicing: Pallas masks the ragged last token block
    # (OOB input rows are unspecified but only feed their own discarded rows).
    xf = x.reshape(n_tok, C)

    fp = _footprint_bytes(tile, C, F, tf, nf, x_item, w_item)
    vmem_limit = int(min(budget, max(32 * 1024 * 1024, int(1.5 * fp))))

    cost = pl.CostEstimate(
        flops=4 * n_tok * C * F,                       # fc1 + fc2
        transcendentals=n_tok,                         # rsqrt per token
        bytes_accessed=(2 * n_tok * C * x_item
                        + 2 * C * F * w_item + (3 * C + F) * 4),
    )

    def run(single_buffer_consts):
        const_kw = ({"pipeline_mode": pl.Buffered(1)}
                    if single_buffer_consts else {})
        # w1/b1/w2 are constant across the grid only when F is not chunked.
        wkw = const_kw if nf == 1 else {}

        in_specs = [
            pl.BlockSpec((tile, C), lambda i, f: (i, 0)),            # x tile
            pl.BlockSpec((1, C), lambda i, f: (0, 0), **const_kw),   # gamma
            pl.BlockSpec((1, C), lambda i, f: (0, 0), **const_kw),   # beta
            pl.BlockSpec((C, tf), lambda i, f: (0, f), **wkw),       # w1 chunk
            pl.BlockSpec((1, tf), lambda i, f: (0, f), **wkw),       # b1 chunk
            pl.BlockSpec((tf, C), lambda i, f: (f, 0), **wkw),       # w2 chunk
            pl.BlockSpec((1, C), lambda i, f: (0, 0), **const_kw),   # b2
        ]
        out_spec = pl.BlockSpec((tile, C), lambda i, f: (i, 0))

        call = pl.pallas_call(
            _ffn_encoder_layer_kernel,
            out_shape=jax.ShapeDtypeStruct((n_tok, C), x.dtype),
            grid_spec=pltpu.PrefetchScalarGridSpec(
                num_scalar_prefetch=0,
                grid=grid,
                in_specs=in_specs,
                out_specs=out_spec,
                scratch_shapes=[
                    pltpu.VMEM((tile, C), w_dtype),       # xn (normalized x)
                    pltpu.VMEM((tile, C), jnp.float32),   # FFN accumulator
                ],
            ),
            compiler_params=pltpu.CompilerParams(
                dimension_semantics=("parallel", "arbitrary"),
                vmem_limit_bytes=vmem_limit,
            ),
            cost_estimate=cost,
        )
        return call(xf, g2, be2, w1, b1_2, w2, b2_2)

    try:
        out = run(True)
    except Exception:
        # Fallback if single-buffered pipeline_mode is rejected by this runtime.
        out = run(False)

    return out.reshape(T, B, C), None


def _reference(x, gamma, beta, w1, b1, w2, b2):
    xf = x.astype(jnp.float32)
    mean = jnp.mean(xf, axis=-1, keepdims=True)
    var = jnp.mean((xf - mean) ** 2, axis=-1, keepdims=True)
    xn = (xf - mean) * jax.lax.rsqrt(var + 1e-5) * gamma + beta
    h = jnp.maximum(xn @ w1.astype(jnp.float32) + b1, 0.0)
    y = h @ w2.astype(jnp.float32) + b2
    return (xf + y).astype(x.dtype)


def _make_inputs(key, T, B, C, F):
    kx, k1, k2, kb1, kb2 = jax.random.split(key, 5)
    x = jax.random.normal(kx, (T, B, C), dtype=jnp.float32)
    gamma = jnp.ones((C,), dtype=jnp.float32)
    beta = jnp.zeros((C,), dtype=jnp.float32)
    w1 = jax.random.normal(k1, (C, F), dtype=jnp.float32) * 0.05
    b1 = jax.random.normal(kb1, (F,), dtype=jnp.float32) * 0.01
    w2 = jax.random.normal(k2, (F, C), dtype=jnp.float32) * 0.05
    b2 = jax.random.normal(kb2, (C,), dtype=jnp.float32) * 0.01
    return x, gamma, beta, w1, b1, w2, b2


if __name__ == "__main__":
    key = jax.random.PRNGKey(0)

    # 1) Module-consistent small shapes: seq=8, batch=2,
    #    encoder_embed_dim=32, encoder_ffn_embed_dim=64.
    T, B, C, F = 8, 2, 32, 64
    x, gamma, beta, w1, b1, w2, b2 = _make_inputs(key, T, B, C, F)
    out, _ = ffn_encoder_layer(x, gamma, beta, w1, b1, w2, b2)
    out = jax.block_until_ready(out)
    ref = _reference(x, gamma, beta, w1, b1, w2, b2)
    assert out.shape == (T, B, C)
    assert jnp.allclose(out, ref, atol=2e-3, rtol=2e-3), "mismatch vs reference"

    # 2) Token count not divisible by 8 (exercises the ragged last block path,
    #    no wrapper padding/slicing).
    T2, B2 = 7, 3
    x2, *_ = _make_inputs(key, T2, B2, C, F)
    out2, _ = ffn_encoder_layer(x2, gamma, beta, w1, b1, w2, b2)
    out2 = jax.block_until_ready(out2)
    ref2 = _reference(x2, gamma, beta, w1, b1, w2, b2)
    assert out2.shape == (T2, B2, C)
    assert jnp.allclose(out2, ref2, atol=2e-3, rtol=2e-3), "mismatch (ragged)"

    # 3) Force the F-chunked accumulator path (2 chunks of 128) at a lane-dense
    #    channel width (C=128).
    C3, F3 = 128, 256
    x3, g3, be3, w13, b13, w23, b23 = _make_inputs(key, T, B, C3, F3)
    out3, _ = ffn_encoder_layer(x3, g3, be3, w13, b13, w23, b23,
                                force_f_chunk=128)
    out3 = jax.block_until_ready(out3)
    ref3 = _reference(x3, g3, be3, w13, b13, w23, b23)
    assert out3.shape == (T, B, C3)
    assert jnp.allclose(out3, ref3, atol=3e-2, rtol=3e-2), "mismatch (F-chunked)"

    # 4) bf16 weight cast (wrapper-side, one-time) with f32 accumulation.
    out4, _ = ffn_encoder_layer(x, gamma, beta, w1, b1, w2, b2,
                                weight_dtype=jnp.bfloat16)
    out4 = jax.block_until_ready(out4)
    assert jnp.allclose(out4, ref, atol=5e-2, rtol=5e-2), "mismatch (bf16 weights)"

    print("KERNEL_OK")
</pallas_src>

<mosaic_0001>
module attributes {stable_mosaic.version = 11 : i64} {
  func.func @_ffn_encoder_layer_kernel(%arg0: i32, %arg1: i32, %arg2: memref<16x32xf32, #tpu.memory_space<vmem>>, %arg3: memref<1x32xf32, #tpu.memory_space<vmem>>, %arg4: memref<1x32xf32, #tpu.memory_space<vmem>>, %arg5: memref<32x64xf32, #tpu.memory_space<vmem>>, %arg6: memref<1x64xf32, #tpu.memory_space<vmem>>, %arg7: memref<64x32xf32, #tpu.memory_space<vmem>>, %arg8: memref<1x32xf32, #tpu.memory_space<vmem>>, %arg9: memref<16x32xf32, #tpu.memory_space<vmem>>, %arg10: memref<16x32xf32, #tpu.memory_space<vmem>>, %arg11: memref<16x32xf32, #tpu.memory_space<vmem>>) attributes {dimension_semantics = [#tpu.dimension_semantics<parallel>, #tpu.dimension_semantics<arbitrary>], iteration_bounds = array<i64: 1, 1>, scalar_prefetch = 0 : i64, scratch_operands = 2 : i64, tpu.core_type = #tpu.core_type<tc>, window_params = [{transform_indices = @transform_0, window_bounds = array<i64: 16, 32>}, {pipeline_mode = #tpu.pipeline_mode<synchronous>, transform_indices = @transform_1, window_bounds = array<i64: 1, 32>}, {pipeline_mode = #tpu.pipeline_mode<synchronous>, transform_indices = @transform_2, window_bounds = array<i64: 1, 32>}, {pipeline_mode = #tpu.pipeline_mode<synchronous>, transform_indices = @transform_3, window_bounds = array<i64: 32, 64>}, {pipeline_mode = #tpu.pipeline_mode<synchronous>, transform_indices = @transform_4, window_bounds = array<i64: 1, 64>}, {pipeline_mode = #tpu.pipeline_mode<synchronous>, transform_indices = @transform_5, window_bounds = array<i64: 64, 32>}, {pipeline_mode = #tpu.pipeline_mode<synchronous>, transform_indices = @transform_6, window_bounds = array<i64: 1, 32>}, {transform_indices = @transform_7, window_bounds = array<i64: 16, 32>}]} {
    %c0_i32 = arith.constant 0 : i32
    %0 = arith.cmpi eq, %arg1, %c0_i32 : i32
    %1 = arith.extui %0 : i1 to i32
    %c0_i32_0 = arith.constant 0 : i32
    %2 = arith.cmpi ne, %1, %c0_i32_0 : i32
    scf.if %2 {
      %c0_16 = arith.constant 0 : index
      %c0_17 = arith.constant 0 : index
      %19 = vector.load %arg2[%c0_16, %c0_17] : memref<16x32xf32, #tpu.memory_space<vmem>>, vector<16x32xf32>
      %cst_18 = arith.constant dense<0.000000e+00> : vector<16xf32>
      %20 = vector.multi_reduction <add>, %19, %cst_18 [1] : vector<16x32xf32> to vector<16xf32>
      %21 = vector.shape_cast %20 : vector<16xf32> to vector<16x1xf32>
      %cst_19 = arith.constant 3.200000e+01 : f32
      %22 = vector.broadcast %cst_19 : f32 to vector<16x1xf32>
      %23 = arith.divf %21, %22 : vector<16x1xf32>
      %24 = vector.broadcast %23 : vector<16x1xf32> to vector<16x32xf32>
      %25 = arith.subf %19, %24 : vector<16x32xf32>
      %26 = arith.mulf %25, %25 : vector<16x32xf32>
      %cst_20 = arith.constant dense<0.000000e+00> : vector<16xf32>
      %27 = vector.multi_reduction <add>, %26, %cst_20 [1] : vector<16x32xf32> to vector<16xf32>
      %28 = vector.shape_cast %27 : vector<16xf32> to vector<16x1xf32>
      %cst_21 = arith.constant 3.200000e+01 : f32
      %29 = vector.broadcast %cst_21 : f32 to vector<16x1xf32>
      %30 = arith.divf %28, %29 : vector<16x1xf32>
      %cst_22 = arith.constant 9.99999974E-6 : f32
      %31 = vector.broadcast %cst_22 : f32 to vector<16x1xf32>
      %32 = arith.addf %30, %31 : vector<16x1xf32>
      %33 = math.rsqrt %32 : vector<16x1xf32>
      %34 = vector.broadcast %33 : vector<16x1xf32> to vector<16x32xf32>
      %35 = arith.mulf %25, %34 : vector<16x32xf32>
      %c0_23 = arith.constant 0 : index
      %c0_24 = arith.constant 0 : index
      %36 = vector.load %arg3[%c0_23, %c0_24] : memref<1x32xf32, #tpu.memory_space<vmem>>, vector<1x32xf32>
      %37 = vector.broadcast %36 : vector<1x32xf32> to vector<16x32xf32>
      %38 = arith.mulf %35, %37 : vector<16x32xf32>
      %c0_25 = arith.constant 0 : index
      %c0_26 = arith.constant 0 : index
      %39 = vector.load %arg4[%c0_25, %c0_26] : memref<1x32xf32, #tpu.memory_space<vmem>>, vector<1x32xf32>
      %40 = vector.broadcast %39 : vector<1x32xf32> to vector<16x32xf32>
      %41 = arith.addf %38, %40 : vector<16x32xf32>
      %c0_27 = arith.constant 0 : index
      %c0_28 = arith.constant 0 : index
      %42 = vector.load %arg10[%c0_27, %c0_28] : memref<16x32xf32, #tpu.memory_space<vmem>>, vector<16x32xf32>
      tpu.vector_store %arg10[%c0_27, %c0_28], %41 {strides = array<i32>} : memref<16x32xf32, #tpu.memory_space<vmem>>, vector<16x32xf32>,
      %cst_29 = arith.constant 0.000000e+00 : f32
      %43 = vector.broadcast %cst_29 : f32 to vector<16x32xf32>
      %c0_30 = arith.constant 0 : index
      %c0_31 = arith.constant 0 : index
      %44 = vector.load %arg11[%c0_30, %c0_31] : memref<16x32xf32, #tpu.memory_space<vmem>>, vector<16x32xf32>
      tpu.vector_store %arg11[%c0_30, %c0_31], %43 {strides = array<i32>} : memref<16x32xf32, #tpu.memory_space<vmem>>, vector<16x32xf32>,
    } else {
    }
    %c0 = arith.constant 0 : index
    %c0_1 = arith.constant 0 : index
    %3 = vector.load %arg10[%c0, %c0_1] : memref<16x32xf32, #tpu.memory_space<vmem>>, vector<16x32xf32>
    %c0_2 = arith.constant 0 : index
    %c0_3 = arith.constant 0 : index
    %4 = vector.load %arg5[%c0_2, %c0_3] : memref<32x64xf32, #tpu.memory_space<vmem>>, vector<32x64xf32>
    %cst = arith.constant dense<0.000000e+00> : vector<16x64xf32>
    %5 = tpu.matmul %3, %4, %cst {dimension_numbers = #tpu.dot_dimension_numbers<[1], [0], [0], [1], [0, 0, 1, 1], [], []>} : vector<16x32xf32>, vector<32x64xf32>, vector<16x64xf32> -> vector<16x64xf32>
    %c0_4 = arith.constant 0 : index
    %c0_5 = arith.constant 0 : index
    %6 = vector.load %arg6[%c0_4, %c0_5] : memref<1x64xf32, #tpu.memory_space<vmem>>, vector<1x64xf32>
    %7 = vector.broadcast %6 : vector<1x64xf32> to vector<16x64xf32>
    %8 = arith.addf %5, %7 : vector<16x64xf32>
    %cst_6 = arith.constant 0.000000e+00 : f32
    %9 = vector.broadcast %cst_6 : f32 to vector<16x64xf32>
    %10 = arith.maximumf %8, %9 : vector<16x64xf32>
    %c0_7 = arith.constant 0 : index
    %c0_8 = arith.constant 0 : index
    %11 = vector.load %arg11[%c0_7, %c0_8] : memref<16x32xf32, #tpu.memory_space<vmem>>, vector<16x32xf32>
    %c0_9 = arith.constant 0 : index
    %c0_10 = arith.constant 0 : index
    %12 = vector.load %arg7[%c0_9, %c0_10] : memref<64x32xf32, #tpu.memory_space<vmem>>, vector<64x32xf32>
    %cst_11 = arith.constant dense<0.000000e+00> : vector<16x32xf32>
    %13 = tpu.matmul %10, %12, %cst_11 {dimension_numbers = #tpu.dot_dimension_numbers<[1], [0], [0], [1], [0, 0, 1, 1], [], []>} : vector<16x64xf32>, vector<64x32xf32>, vector<16x32xf32> -> vector<16x32xf32>
    %14 = arith.addf %11, %13 : vector<16x32xf32>
    %c0_12 = arith.constant 0 : index
    %c0_13 = arith.constant 0 : index
    %15 = vector.load %arg11[%c0_12, %c0_13] : memref<16x32xf32, #tpu.memory_space<vmem>>, vector<16x32xf32>
    tpu.vector_store %arg11[%c0_12, %c0_13], %14 {strides = array<i32>} : memref<16x32xf32, #tpu.memory_space<vmem>>, vector<16x32xf32>,
    %c0_i32_14 = arith.constant 0 : i32
    %16 = arith.cmpi eq, %arg1, %c0_i32_14 : i32
    %17 = arith.extui %16 : i1 to i32
    %c0_i32_15 = arith.constant 0 : i32
    %18 = arith.cmpi ne, %17, %c0_i32_15 : i32
    scf.if %18 {
      %c0_16 = arith.constant 0 : index
      %c0_17 = arith.constant 0 : index
      %19 = vector.load %arg11[%c0_16, %c0_17] : memref<16x32xf32, #tpu.memory_space<vmem>>, vector<16x32xf32>
      %c0_18 = arith.constant 0 : index
      %c0_19 = arith.constant 0 : index
      %20 = vector.load %arg8[%c0_18, %c0_19] : memref<1x32xf32, #tpu.memory_space<vmem>>, vector<1x32xf32>
      %21 = vector.broadcast %20 : vector<1x32xf32> to vector<16x32xf32>
      %22 = arith.addf %19, %21 : vector<16x32xf32>
      %c0_20 = arith.constant 0 : index
      %c0_21 = arith.constant 0 : index
      %23 = vector.load %arg2[%c0_20, %c0_21] : memref<16x32xf32, #tpu.memory_space<vmem>>, vector<16x32xf32>
      %24 = arith.addf %23, %22 : vector<16x32xf32>
      %c0_22 = arith.constant 0 : index
      %c0_23 = arith.constant 0 : index
      %25 = vector.load %arg9[%c0_22, %c0_23] : memref<16x32xf32, #tpu.memory_space<vmem>>, vector<16x32xf32>
      tpu.vector_store %arg9[%c0_22, %c0_23], %24 {strides = array<i32>} : memref<16x32xf32, #tpu.memory_space<vmem>>, vector<16x32xf32>,
    } else {
    }
    return
  }
  func.func @transform_0(%arg0: i32, %arg1: i32) -> (i32, i32) {
    %c0_i32 = arith.constant 0 : i32
    %c0_i32_0 = arith.constant 0 : i32
    return %arg0, %c0_i32 : i32, i32
  }
  func.func @transform_1(%arg0: i32, %arg1: i32) -> (i32, i32) {
    %c0_i32 = arith.constant 0 : i32
    %c0_i32_0 = arith.constant 0 : i32
    %c0_i32_1 = arith.constant 0 : i32
    return %c0_i32, %c0_i32_0 : i32, i32
  }
  func.func @transform_2(%arg0: i32, %arg1: i32) -> (i32, i32) {
    %c0_i32 = arith.constant 0 : i32
    %c0_i32_0 = arith.constant 0 : i32
    %c0_i32_1 = arith.constant 0 : i32
    return %c0_i32, %c0_i32_0 : i32, i32
  }
  func.func @transform_3(%arg0: i32, %arg1: i32) -> (i32, i32) {
    %c0_i32 = arith.constant 0 : i32
    %c0_i32_0 = arith.constant 0 : i32
    return %c0_i32, %arg1 : i32, i32
  }
  func.func @transform_4(%arg0: i32, %arg1: i32) -> (i32, i32) {
    %c0_i32 = arith.constant 0 : i32
    %c0_i32_0 = arith.constant 0 : i32
    return %c0_i32, %arg1 : i32, i32
  }
  func.func @transform_5(%arg0: i32, %arg1: i32) -> (i32, i32) {
    %c0_i32 = arith.constant 0 : i32
    %c0_i32_0 = arith.constant 0 : i32
    return %arg1, %c0_i32 : i32, i32
  }
  func.func @transform_6(%arg0: i32, %arg1: i32) -> (i32, i32) {
    %c0_i32 = arith.constant 0 : i32
    %c0_i32_0 = arith.constant 0 : i32
    %c0_i32_1 = arith.constant 0 : i32
    return %c0_i32, %c0_i32_0 : i32, i32
  }
  func.func @transform_7(%arg0: i32, %arg1: i32) -> (i32, i32) {
    %c0_i32 = arith.constant 0 : i32
    %c0_i32_0 = arith.constant 0 : i32
    return %arg0, %c0_i32 : i32, i32
  }
}

module attributes {stable_mosaic.version = 11 : i64} {
  func.func @_ffn_encoder_layer_kernel(%arg0: i32, %arg1: i32, %arg2: memref<16x32xf32, #tpu.memory_space<vmem>>, %arg3: memref<1x32xf32, #tpu.memory_space<vmem>>, %arg4: memref<1x32xf32, #tpu.memory_space<vmem>>, %arg5: memref<32x64xf32, #tpu.memory_space<vmem>>, %arg6: memref<1x64xf32, #tpu.memory_space<vmem>>, %arg7: memref<64x32xf32, #tpu.memory_space<vmem>>, %arg8: memref<1x32xf32, #tpu.memory_space<vmem>>, %arg9: memref<16x32xf32, #tpu.memory_space<vmem>>, %arg10: memref<16x32xf32, #tpu.memory_space<vmem>>, %arg11: memref<16x32xf32, #tpu.memory_space<vmem>>) attributes {dimension_semantics = [#tpu.dimension_semantics<parallel>, #tpu.dimension_semantics<arbitrary>], iteration_bounds = array<i64: 1, 1>, scalar_prefetch = 0 : i64, scratch_operands = 2 : i64, tpu.core_type = #tpu.core_type<tc>, window_params = [{transform_indices = @transform_0, window_bounds = array<i64: 16, 32>}, {pipeline_mode = #tpu.pipeline_mode<synchronous>, transform_indices = @transform_1, window_bounds = array<i64: 1, 32>}, {pipeline_mode = #tpu.pipeline_mode<synchronous>, transform_indices = @transform_2, window_bounds = array<i64: 1, 32>}, {transform_indices = @transform_3, window_bounds = array<i64: 32, 64>}, {transform_indices = @transform_4, window_bounds = array<i64: 1, 64>}, {transform_indices = @transform_5, window_bounds = array<i64: 64, 32>}, {pipeline_mode = #tpu.pipeline_mode<synchronous>, transform_indices = @transform_6, window_bounds = array<i64: 1, 32>}, {transform_indices = @transform_7, window_bounds = array<i64: 16, 32>}]} {
    %c0_i32 = arith.constant 0 : i32
    %0 = arith.cmpi eq, %arg1, %c0_i32 : i32
    %1 = arith.extui %0 : i1 to i32
    %c0_i32_0 = arith.constant 0 : i32
    %2 = arith.cmpi ne, %1, %c0_i32_0 : i32
    scf.if %2 {
      %c0_16 = arith.constant 0 : index
      %c0_17 = arith.constant 0 : index
      %19 = vector.load %arg2[%c0_16, %c0_17] : memref<16x32xf32, #tpu.memory_space<vmem>>, vector<16x32xf32>
      %cst_18 = arith.constant dense<0.000000e+00> : vector<16xf32>
      %20 = vector.multi_reduction <add>, %19, %cst_18 [1] : vector<16x32xf32> to vector<16xf32>
      %21 = vector.shape_cast %20 : vector<16xf32> to vector<16x1xf32>
      %cst_19 = arith.constant 3.200000e+01 : f32
      %22 = vector.broadcast %cst_19 : f32 to vector<16x1xf32>
      %23 = arith.divf %21, %22 : vector<16x1xf32>
      %24 = vector.broadcast %23 : vector<16x1xf32> to vector<16x32xf32>
      %25 = arith.subf %19, %24 : vector<16x32xf32>
      %26 = arith.mulf %25, %25 : vector<16x32xf32>
      %cst_20 = arith.constant dense<0.000000e+00> : vector<16xf32>
      %27 = vector.multi_reduction <add>, %26, %cst_20 [1] : vector<16x32xf32> to vector<16xf32>
      %28 = vector.shape_cast %27 : vector<16xf32> to vector<16x1xf32>
      %cst_21 = arith.constant 3.200000e+01 : f32
      %29 = vector.broadcast %cst_21 : f32 to vector<16x1xf32>
      %30 = arith.divf %28, %29 : vector<16x1xf32>
      %cst_22 = arith.constant 9.99999974E-6 : f32
      %31 = vector.broadcast %cst_22 : f32 to vector<16x1xf32>
      %32 = arith.addf %30, %31 : vector<16x1xf32>
      %33 = math.rsqrt %32 : vector<16x1xf32>
      %34 = vector.broadcast %33 : vector<16x1xf32> to vector<16x32xf32>
      %35 = arith.mulf %25, %34 : vector<16x32xf32>
      %c0_23 = arith.constant 0 : index
      %c0_24 = arith.constant 0 : index
      %36 = vector.load %arg3[%c0_23, %c0_24] : memref<1x32xf32, #tpu.memory_space<vmem>>, vector<1x32xf32>
      %37 = vector.broadcast %36 : vector<1x32xf32> to vector<16x32xf32>
      %38 = arith.mulf %35, %37 : vector<16x32xf32>
      %c0_25 = arith.constant 0 : index
      %c0_26 = arith.constant 0 : index
      %39 = vector.load %arg4[%c0_25, %c0_26] : memref<1x32xf32, #tpu.memory_space<vmem>>, vector<1x32xf32>
      %40 = vector.broadcast %39 : vector<1x32xf32> to vector<16x32xf32>
      %41 = arith.addf %38, %40 : vector<16x32xf32>
      %c0_27 = arith.constant 0 : index
      %c0_28 = arith.constant 0 : index
      %42 = vector.load %arg10[%c0_27, %c0_28] : memref<16x32xf32, #tpu.memory_space<vmem>>, vector<16x32xf32>
      tpu.vector_store %arg10[%c0_27, %c0_28], %41 {strides = array<i32>} : memref<16x32xf32, #tpu.memory_space<vmem>>, vector<16x32xf32>,
      %cst_29 = arith.constant 0.000000e+00 : f32
      %43 = vector.broadcast %cst_29 : f32 to vector<16x32xf32>
      %c0_30 = arith.constant 0 : index
      %c0_31 = arith.constant 0 : index
      %44 = vector.load %arg11[%c0_30, %c0_31] : memref<16x32xf32, #tpu.memory_space<vmem>>, vector<16x32xf32>
      tpu.vector_store %arg11[%c0_30, %c0_31], %43 {strides = array<i32>} : memref<16x32xf32, #tpu.memory_space<vmem>>, vector<16x32xf32>,
    } else {
    }
    %c0 = arith.constant 0 : index
    %c0_1 = arith.constant 0 : index
    %3 = vector.load %arg10[%c0, %c0_1] : memref<16x32xf32, #tpu.memory_space<vmem>>, vector<16x32xf32>
    %c0_2 = arith.constant 0 : index
    %c0_3 = arith.constant 0 : index
    %4 = vector.load %arg5[%c0_2, %c0_3] : memref<32x64xf32, #tpu.memory_space<vmem>>, vector<32x64xf32>
    %cst = arith.constant dense<0.000000e+00> : vector<16x64xf32>
    %5 = tpu.matmul %3, %4, %cst {dimension_numbers = #tpu.dot_dimension_numbers<[1], [0], [0], [1], [0, 0, 1, 1], [], []>} : vector<16x32xf32>, vector<32x64xf32>, vector<16x64xf32> -> vector<16x64xf32>
    %c0_4 = arith.constant 0 : index
    %c0_5 = arith.constant 0 : index
    %6 = vector.load %arg6[%c0_4, %c0_5] : memref<1x64xf32, #tpu.memory_space<vmem>>, vector<1x64xf32>
    %7 = vector.broadcast %6 : vector<1x64xf32> to vector<16x64xf32>
    %8 = arith.addf %5, %7 : vector<16x64xf32>
    %cst_6 = arith.constant 0.000000e+00 : f32
    %9 = vector.broadcast %cst_6 : f32 to vector<16x64xf32>
    %10 = arith.maximumf %8, %9 : vector<16x64xf32>
    %c0_7 = arith.constant 0 : index
    %c0_8 = arith.constant 0 : index
    %11 = vector.load %arg11[%c0_7, %c0_8] : memref<16x32xf32, #tpu.memory_space<vmem>>, vector<16x32xf32>
    %c0_9 = arith.constant 0 : index
    %c0_10 = arith.constant 0 : index
    %12 = vector.load %arg7[%c0_9, %c0_10] : memref<64x32xf32, #tpu.memory_space<vmem>>, vector<64x32xf32>
    %cst_11 = arith.constant dense<0.000000e+00> : vector<16x32xf32>
    %13 = tpu.matmul %10, %12, %cst_11 {dimension_numbers = #tpu.dot_dimension_numbers<[1], [0], [0], [1], [0, 0, 1, 1], [], []>} : vector<16x64xf32>, vector<64x32xf32>, vector<16x32xf32> -> vector<16x32xf32>
    %14 = arith.addf %11, %13 : vector<16x32xf32>
    %c0_12 = arith.constant 0 : index
    %c0_13 = arith.constant 0 : index
    %15 = vector.load %arg11[%c0_12, %c0_13] : memref<16x32xf32, #tpu.memory_space<vmem>>, vector<16x32xf32>
    tpu.vector_store %arg11[%c0_12, %c0_13], %14 {strides = array<i32>} : memref<16x32xf32, #tpu.memory_space<vmem>>, vector<16x32xf32>,
    %c0_i32_14 = arith.constant 0 : i32
    %16 = arith.cmpi eq, %arg1, %c0_i32_14 : i32
    %17 = arith.extui %16 : i1 to i32
    %c0_i32_15 = arith.constant 0 : i32
    %18 = arith.cmpi ne, %17, %c0_i32_15 : i32
    scf.if %18 {
      %c0_16 = arith.constant 0 : index
      %c0_17 = arith.constant 0 : index
      %19 = vector.load %arg11[%c0_16, %c0_17] : memref<16x32xf32, #tpu.memory_space<vmem>>, vector<16x32xf32>
      %c0_18 = arith.constant 0 : index
      %c0_19 = arith.constant 0 : index
      %20 = vector.load %arg8[%c0_18, %c0_19] : memref<1x32xf32, #tpu.memory_space<vmem>>, vector<1x32xf32>
      %21 = vector.broadcast %20 : vector<1x32xf32> to vector<16x32xf32>
      %22 = arith.addf %19, %21 : vector<16x32xf32>
      %c0_20 = arith.constant 0 : index
      %c0_21 = arith.constant 0 : index
      %23 = vector.load %arg2[%c0_20, %c0_21] : memref<16x32xf32, #tpu.memory_space<vmem>>, vector<16x32xf32>
      %24 = arith.addf %23, %22 : vector<16x32xf32>
      %c0_22 = arith.constant 0 : index
      %c0_23 = arith.constant 0 : index
      %25 = vector.load %arg9[%c0_22, %c0_23] : memref<16x32xf32, #tpu.memory_space<vmem>>, vector<16x32xf32>
      tpu.vector_store %arg9[%c0_22, %c0_23], %24 {strides = array<i32>} : memref<16x32xf32, #tpu.memory_space<vmem>>, vector<16x32xf32>,
    } else {
    }
    return
  }
  func.func @transform_0(%arg0: i32, %arg1: i32) -> (i32, i32) {
    %c0_i32 = arith.constant 0 : i32
    %c0_i32_0 = arith.constant 0 : i32
    return %arg0, %c0_i32 : i32, i32
  }
  func.func @transform_1(%arg0: i32, %arg1: i32) -> (i32, i32) {
    %c0_i32 = arith.constant 0 : i32
    %c0_i32_0 = arith.constant 0 : i32
    %c0_i32_1 = arith.constant 0 : i32
    return %c0_i32, %c0_i32_0 : i32, i32
  }
  func.func @transform_2(%arg0: i32, %arg1: i32) -> (i32, i32) {
    %c0_i32 = arith.constant 0 : i32
    %c0_i32_0 = arith.constant 0 : i32
    %c0_i32_1 = arith.constant 0 : i32
    return %c0_i32, %c0_i32_0 : i32, i32
  }
  func.func @transform_3(%arg0: i32, %arg1: i32) -> (i32, i32) {
    %c0_i32 = arith.constant 0 : i32
    %c0_i32_0 = arith.constant 0 : i32
    return %c0_i32, %arg1 : i32, i32
  }
  func.func @transform_4(%arg0: i32, %arg1: i32) -> (i32, i32) {
    %c0_i32 = arith.constant 0 : i32
    %c0_i32_0 = arith.constant 0 : i32
    return %c0_i32, %arg1 : i32, i32
  }
  func.func @transform_5(%arg0: i32, %arg1: i32) -> (i32, i32) {
    %c0_i32 = arith.constant 0 : i32
    %c0_i32_0 = arith.constant 0 : i32
    return %arg1, %c0_i32 : i32, i32
  }
  func.func @transform_6(%arg0: i32, %arg1: i32) -> (i32, i32) {
    %c0_i32 = arith.constant 0 : i32
    %c0_i32_0 = arith.constant 0 : i32
    %c0_i32_1 = arith.constant 0 : i32
    return %c0_i32, %c0_i32_0 : i32, i32
  }
  func.func @transform_7(%arg0: i32, %arg1: i32) -> (i32, i32) {
    %c0_i32 = arith.constant 0 : i32
    %c0_i32_0 = arith.constant 0 : i32
    return %arg0, %c0_i32 : i32, i32
  }
}

</mosaic_0001>

<llo_original>
// kernel: tpu_custom_call.1
$region0: #{tpu_custom_call.1}
  #allocation0 [shape = 'u32[]', space=smem, size = 0x4, offset = 0x4, fixed_abs, tag = 'smem constant byte address 0x4 - core index']
  #allocation1 [shape = 'u32[144,128]{1,0:T(1,128)}', space=vmem, size = 0x12000, scoped, tag = 'internal scratch']
  #allocation2 [shape = 'f32[16,32]{1,0:T(8,128)}', space=vmem, size = 0x2000, scoped, tag = 'scratch operand']
  #allocation3 [shape = 'f32[16,32]{1,0:T(8,128)}', space=vmem, size = 0x2000, scoped, tag = 'scratch operand']
  %s0 = inlined_call_operand.vmem [shape: f32[16,32], index: 0, kind: input, shape index: {}]
  %s1 = inlined_call_operand.vmem [shape: f32[1,32], index: 1, kind: input, shape index: {}]
  %s2 = inlined_call_operand.vmem [shape: f32[1,32], index: 2, kind: input, shape index: {}]
  %s3 = inlined_call_operand.vmem [shape: f32[32,64], index: 3, kind: input, shape index: {}]
  %s4 = inlined_call_operand.vmem [shape: f32[1,64], index: 4, kind: input, shape index: {}]
  %s5 = inlined_call_operand.vmem [shape: f32[64,32], index: 5, kind: input, shape index: {}]
  %s6 = inlined_call_operand.vmem [shape: f32[1,32], index: 6, kind: input, shape index: {}]
  %s7 = inlined_call_operand.hbm [shape: f32[16,32], index: 7, kind: output, shape index: {}]
  %s8 = sld [smem:[#allocation0]]
  $region46: #{tpu_custom_call.1} parent=0
    _
  %s10 = ssub.s32 1, %s8
  %s11 = scalar_select 0, %s10, %s8
  $region1: #{tpu_custom_call.1} parent=0
    #allocation4 [shape = 'u8[8192]{0}', space=vmem, size = 0x2000, scoped, tag = 'output window, operand 0, single buffered']
    #allocation5 [shape = 's32[1]{0}', space=sflag, size = 0x4, scoped, tag = 'scoped memory for tpu_custom_call.1']
    %12 = vsyncpa [#allocation5], 0
    // Predicated region
    $region2: #{tpu_custom_call.1} parent=1 // pred_check
      _
    $region3: #{tpu_custom_call.1} parent=1 // pred_check_branch
      %14 = sbr.rel (0) target = $region5
    $region4: #{tpu_custom_call.1} parent=1 // pred_region
      _
    $region5: #{tpu_custom_call.1} parent=1 // pred_fallthru
      _
    // Predicated region
    $region6: #{tpu_custom_call.1} parent=1 // pred_check
      _
    $region7: #{tpu_custom_call.1} parent=1 // pred_check_branch
      %16 = sbr.rel (0) target = $region9
    $region8: #{tpu_custom_call.1} parent=1 // pred_region
      _
    $region9: #{tpu_custom_call.1} parent=1 // pred_fallthru
      _
    // Predicated region
    $region10: #{tpu_custom_call.1} parent=1 // pred_check
      _
    $region11: #{tpu_custom_call.1} parent=1 // pred_check_branch
      %18 = sbr.rel (0) target = $region13
    $region12: #{tpu_custom_call.1} parent=1 // pred_region
      _
    $region13: #{tpu_custom_call.1} parent=1 // pred_fallthru
      _
    // Predicated region
    $region14: #{tpu_custom_call.1} parent=1 // pred_check
      _
    $region15: #{tpu_custom_call.1} parent=1 // pred_check_branch
      %20 = sbr.rel (0) target = $region17
    $region16: #{tpu_custom_call.1} parent=1 // pred_region
      _
    $region17: #{tpu_custom_call.1} parent=1 // pred_fallthru
      _
    // Predicated region
    $region18: #{tpu_custom_call.1} parent=1 // pred_check
      _
    $region19: #{tpu_custom_call.1} parent=1 // pred_check_branch
      %22 = sbr.rel (0) target = $region21
    $region20: #{tpu_custom_call.1} parent=1 // pred_region
      _
    $region21: #{tpu_custom_call.1} parent=1 // pred_fallthru
      _
    // Predicated region
    $region22: #{tpu_custom_call.1} parent=1 // pred_check
      _
    $region23: #{tpu_custom_call.1} parent=1 // pred_check_branch
      %24 = sbr.rel (0) target = $region25
    $region24: #{tpu_custom_call.1} parent=1 // pred_region
      _
    $region25: #{tpu_custom_call.1} parent=1 // pred_fallthru
      _
    // Predicated region
    $region26: #{tpu_custom_call.1} parent=1 // pred_check
      _
    $region27: #{tpu_custom_call.1} parent=1 // pred_check_branch
      %26 = sbr.rel (0) target = $region29
    $region28: #{tpu_custom_call.1} parent=1 // pred_region
      _
    $region29: #{tpu_custom_call.1} parent=1 // pred_fallthru
      _
    %p27 = scmp.eq.s32.totalorder 0, 0
    // Predicated region
    $region30: #{tpu_custom_call.1} parent=1 // pred_check
      %p28 = pneg %p27
    $region31: #{tpu_custom_call.1} parent=1 // pred_check_branch
      %30 = sbr.rel (%p28) target = $region33
    $region32: #{tpu_custom_call.1} parent=1 // pred_region
      %v31 = vld [vmem:[%s0] sm:$0xff]
      %v32 = vld [vmem:[%s0 + $0x8] sm:$0xff]
      %vm33 = vcmask 261120
      %v34 = vsel %vm33, %v31, 0.0
      %35 = vadd.xlane.f32.xlu0 %v34
      %v36 = vpop.xlane.xlu0 %35
      %v37 = vsel %vm33, %v32, 0.0
      %38 = vadd.xlane.f32.xlu0 %v37
      %v39 = vpop.xlane.xlu0 %38
      %v40 = vrcp.pop 32.0
      %v41 = vmul.f32 %v36, %v40
      %v42 = vmul.f32 %v39, %v40
      %v43 = vsub.f32 %v31, %v41
      %v44 = vsub.f32 %v32, %v42
      %v45 = vmul.f32 %v43, %v43
      %v46 = vmul.f32 %v44, %v44
      %v47 = vsel %vm33, %v45, 0.0
      %48 = vadd.xlane.f32.xlu0 %v47
      %v49 = vpop.xlane.xlu0 %48
      %v50 = vsel %vm33, %v46, 0.0
      %51 = vadd.xlane.f32.xlu0 %v50
      %v52 = vpop.xlane.xlu0 %51
      %v53 = vmul.f32 %v49, %v40
      %v54 = vmul.f32 %v52, %v40
      %v55 = vadd.f32 %v53, 1e-05
      %v56 = vadd.f32 %v54, 1e-05
      %v57 = vrsqrt.pop %v55
      %v58 = vrsqrt.pop %v56
      %v59 = vmul.f32 %v43, %v57
      %v60 = vmul.f32 %v44, %v58
      %v61 = vld [vmem:[%s1] sm:$0x1]
      %v63 = vlaneseq
      %v64 = vshrl.u32 %v63, 7
      %v65 = vsub.s32 0, %v64
      %v66 = vrot.slane %v61, %v65
      %v68 = vmul.f32 %v59, %v66
      %v69 = vmul.f32 %v60, %v66
      %v70 = vld [vmem:[%s2] sm:$0x1]
      %v72 = vlaneseq
      %v73 = vshrl.u32 %v72, 7
      %v74 = vsub.s32 0, %v73
      %v75 = vrot.slane %v70, %v74
      %v77 = vadd.f32 %v68, %v75
      %v78 = vadd.f32 %v69, %v75
      %79 = vst.msk [vmem:[#allocation2] sm:$0xff] %vm33, %v77
      %80 = vst.msk [vmem:[#allocation2 + $0x8] sm:$0xff] %vm33, %v78
      %81 = vst.msk [vmem:[#allocation3] sm:$0xff] %vm33, 0.0
      %82 = vst.msk [vmem:[#allocation3 + $0x8] sm:$0xff] %vm33, 0.0
    $region33: #{tpu_custom_call.1} parent=1 // pred_fallthru
      _
    %v83 = vld [vmem:[#allocation2] sm:$0xff]
    %v84 = vld [vmem:[#allocation2 + $0x8] sm:$0xff]
    %v85 = vld [vmem:[%s3] sm:$0xff]
    %v86 = vld [vmem:[%s3 + $0x8] sm:$0xff]
    %v87 = vld [vmem:[%s3 + $0x10] sm:$0xff]
    %v88 = vld [vmem:[%s3 + $0x18] sm:$0xff]
    %v89 = vld [vmem:[%s4] sm:$0x1]
    %v91 = vlaneseq
    %v92 = vshrl.u32 %v91, 7
    %v93 = vsub.s32 0, %v92
    %v94 = vrot.slane %v89, %v93
    %vm96 = vcmask 261120
    %v98 = vsel %vm96, %v83, 0
    %v101 = vsel %vm96, %v84, 0
    %103 = vmatprep.subr.mxu0 0.0
    %104 = vmatpush1.msra.mxu0 0.0
    %105 = vmatprep.subr.mxu0 0.0
    %106 = vmatpush1.msra.mxu0 0.0
    %107 = vmatprep.subr.mxu0 0.0
    %108 = vmatpush1.msra.mxu0 0.0
    %109 = vmatprep.subr.mxu0 0.0
    %110 = vmatpush1.msra.mxu0 0.0
    %111 = vmatprep.subr.mxu0 0.0
    %112 = vmatpush1.msra.mxu0 0.0
    %113 = vmatprep.subr.mxu0 0.0
    %114 = vmatpush1.msra.mxu0 0.0
    %115 = vmatprep.subr.mxu0 0.0
    %116 = vmatpush1.msra.mxu0 0.0
    %117 = vmatprep.subr.mxu0 0.0
    %118 = vmatpush1.msra.mxu0 0.0
    %119 = vmatprep.subr.mxu0 0.0
    %120 = vmatpush1.msra.mxu0 0.0
    %121 = vmatprep.subr.mxu0 0.0
    %122 = vmatpush1.msra.mxu0 0.0
    %123 = vmatprep.subr.mxu0 0.0
    %124 = vmatpush1.msra.mxu0 0.0
    %125 = vmatprep.subr.mxu0 0.0
    %126 = vmatpush1.msra.mxu0 0.0
    %127 = vmatprep.subr.mxu0 0.0
    %128 = vmatpush1.msra.mxu0 %v88
    %129 = vmatprep.subr.mxu0 0.0
    %130 = vmatpush1.msra.mxu0 %v87
    %131 = vmatprep.subr.mxu0 0.0
    %132 = vmatpush1.msra.mxu0 %v86
    %133 = vmatprep.subr.mxu0 0.0
    %134 = vmatpush1.msra.mxu0 %v85
    %135 = vmatprep.subr.mxu0 0.0
    %136 = vmatpush2.msra.mxu0 0.0
    %137 = vmatprep.subr.mxu0 0.0
    %138 = vmatpush2.msra.mxu0 0.0
    %139 = vmatprep.subr.mxu0 0.0
    %140 = vmatpush2.msra.mxu0 0.0
    %141 = vmatprep.subr.mxu0 0.0
    %142 = vmatpush2.msra.mxu0 0.0
    %143 = vmatprep.subr.mxu0 0.0
    %144 = vmatpush2.msra.mxu0 0.0
    %145 = vmatprep.subr.mxu0 0.0
    %146 = vmatpush2.msra.mxu0 0.0
    %147 = vmatprep.subr.mxu0 0.0
    %148 = vmatpush2.msra.mxu0 0.0
    %149 = vmatprep.subr.mxu0 0.0
    %150 = vmatpush2.msra.mxu0 0.0
    %151 = vmatprep.subr.mxu0 0.0
    %152 = vmatpush2.msra.mxu0 0.0
    %153 = vmatprep.subr.mxu0 0.0
    %154 = vmatpush2.msra.mxu0 0.0
    %155 = vmatprep.subr.mxu0 0.0
    %156 = vmatpush2.msra.mxu0 0.0
    %157 = vmatprep.subr.mxu0 0.0
    %158 = vmatpush2.msra.mxu0 0.0
    %159 = vmatprep.subr.mxu0 0.0
    %160 = vmatpush2.msra.mxu0 0.0
    %161 = vmatprep.subr.mxu0 0.0
    %162 = vmatpush2.msra.mxu0 0.0
    %163 = vmatprep.subr.mxu0 0.0
    %164 = vmatpush2.msra.mxu0 0.0
    %165 = vmatprep.subr.mxu0 0.0
    %166 = vmatpush2.msra.mxu0 0.0
    %167 = vmatprep.mubr.f32.mxu0 0.0
    %168 = vmatmul.mubr.f32.gmra.mxu0 %v98
    %v169 = vpop.f32.mrf.mxu0
    %v170 = vadd.f32 %v94, %v169
    %v171 = vpop.f32.mrf.mxu0
    %172 = vmatprep.mubr.f32.mxu0 0.0
    %173 = vmatmul.mubr.f32.gmra.mxu0 %v101
    %v174 = vpop.f32.mrf.mxu0
    %v175 = vadd.f32 %v94, %v174
    %v176 = vpop.f32.mrf.mxu0
    %177 = vdwg.mxu0
    %v178 = vmax.f32 %v170, 0.0
    %v179 = vmax.f32 %v175, 0.0
    %v180 = vld [vmem:[#allocation3] sm:$0xff]
    %v181 = vld [vmem:[#allocation3 + $0x8] sm:$0xff]
    %v182 = vld [vmem:[%s5] sm:$0xff]
    %v183 = vld [vmem:[%s5 + $0x8] sm:$0xff]
    %v184 = vld [vmem:[%s5 + $0x10] sm:$0xff]
    %v185 = vld [vmem:[%s5 + $0x18] sm:$0xff]
    %v186 = vld [vmem:[%s5 + $0x20] sm:$0xff]
    %v187 = vld [vmem:[%s5 + $0x28] sm:$0xff]
    %v188 = vld [vmem:[%s5 + $0x30] sm:$0xff]
    %v189 = vld [vmem:[%s5 + $0x38] sm:$0xff]
    %vm190 = vcmask 523264
    %v192 = vsel %vm190, %v178, 0
    %v195 = vsel %vm190, %v179, 0
    %197 = vmatprep.subr.mxu0 0.0
    %198 = vmatpush1.msra.mxu0 0.0
    %199 = vmatprep.subr.mxu0 0.0
    %200 = vmatpush1.msra.mxu0 0.0
    %201 = vmatprep.subr.mxu0 0.0
    %202 = vmatpush1.msra.mxu0 0.0
    %203 = vmatprep.subr.mxu0 0.0
    %204 = vmatpush1.msra.mxu0 0.0
    %205 = vmatprep.subr.mxu0 0.0
    %206 = vmatpush1.msra.mxu0 0.0
    %207 = vmatprep.subr.mxu0 0.0
    %208 = vmatpush1.msra.mxu0 0.0
    %209 = vmatprep.subr.mxu0 0.0
    %210 = vmatpush1.msra.mxu0 0.0
    %211 = vmatprep.subr.mxu0 0.0
    %212 = vmatpush1.msra.mxu0 0.0
    %213 = vmatprep.subr.mxu0 0.0
    %214 = vmatpush1.msra.mxu0 %v189
    %215 = vmatprep.subr.mxu0 0.0
    %216 = vmatpush1.msra.mxu0 %v188
    %217 = vmatprep.subr.mxu0 0.0
    %218 = vmatpush1.msra.mxu0 %v187
    %219 = vmatprep.subr.mxu0 0.0
    %220 = vmatpush1.msra.mxu0 %v186
    %221 = vmatprep.subr.mxu0 0.0
    %222 = vmatpush1.msra.mxu0 %v185
    %223 = vmatprep.subr.mxu0 0.0
    %224 = vmatpush1.msra.mxu0 %v184
    %225 = vmatprep.subr.mxu0 0.0
    %226 = vmatpush1.msra.mxu0 %v183
    %227 = vmatprep.subr.mxu0 0.0
    %228 = vmatpush1.msra.mxu0 %v182
    %229 = vmatprep.subr.mxu0 0.0
    %230 = vmatpush2.msra.mxu0 0.0
    %231 = vmatprep.subr.mxu0 0.0
    %232 = vmatpush2.msra.mxu0 0.0
    %233 = vmatprep.subr.mxu0 0.0
    %234 = vmatpush2.msra.mxu0 0.0
    %235 = vmatprep.subr.mxu0 0.0
    %236 = vmatpush2.msra.mxu0 0.0
    %237 = vmatprep.subr.mxu0 0.0
    %238 = vmatpush2.msra.mxu0 0.0
    %239 = vmatprep.subr.mxu0 0.0
    %240 = vmatpush2.msra.mxu0 0.0
    %241 = vmatprep.subr.mxu0 0.0
    %242 = vmatpush2.msra.mxu0 0.0
    %243 = vmatprep.subr.mxu0 0.0
    %244 = vmatpush2.msra.mxu0 0.0
    %245 = vmatprep.subr.mxu0 0.0
    %246 = vmatpush2.msra.mxu0 0.0
    %247 = vmatprep.subr.mxu0 0.0
    %248 = vmatpush2.msra.mxu0 0.0
    %249 = vmatprep.subr.mxu0 0.0
    %250 = vmatpush2.msra.mxu0 0.0
    %251 = vmatprep.subr.mxu0 0.0
    %252 = vmatpush2.msra.mxu0 0.0
    %253 = vmatprep.subr.mxu0 0.0
    %254 = vmatpush2.msra.mxu0 0.0
    %255 = vmatprep.subr.mxu0 0.0
    %256 = vmatpush2.msra.mxu0 0.0
    %257 = vmatprep.subr.mxu0 0.0
    %258 = vmatpush2.msra.mxu0 0.0
    %259 = vmatprep.subr.mxu0 0.0
    %260 = vmatpush2.msra.mxu0 0.0
    %261 = vmatprep.mubr.f32.mxu0 0.0
    %262 = vmatmul.mubr.f32.gmra.mxu0 %v192
    %v263 = vpop.f32.mrf.mxu0
    %v264 = vadd.f32 0.0, %v263
    %v265 = vpop.f32.mrf.mxu0
    %266 = vmatprep.mubr.f32.mxu0 0.0
    %267 = vmatmul.mubr.f32.gmra.mxu0 %v195
    %v268 = vpop.f32.mrf.mxu0
    %v269 = vadd.f32 0.0, %v268
    %v270 = vpop.f32.mrf.mxu0
    %271 = vdwg.mxu0
    %v272 = vadd.f32 %v180, %v264
    %v273 = vadd.f32 %v181, %v269
    %274 = vst.msk [vmem:[#allocation3] sm:$0xff] %vm96, %v272
    %275 = vst.msk [vmem:[#allocation3 + $0x8] sm:$0xff] %vm96, %v273
    // Predicated region
    $region34: #{tpu_custom_call.1} parent=1 // pred_check
      %p276 = pneg %p27
    $region35: #{tpu_custom_call.1} parent=1 // pred_check_branch
      %278 = sbr.rel (%p276) target = $region37
    $region36: #{tpu_custom_call.1} parent=1 // pred_region
      %v279 = vld [vmem:[#allocation3] sm:$0xff]
      %v280 = vld [vmem:[#allocation3 + $0x8] sm:$0xff]
      %v281 = vld [vmem:[%s6] sm:$0x1]
      %v283 = vlaneseq
      %v284 = vshrl.u32 %v283, 7
      %v285 = vsub.s32 0, %v284
      %v286 = vrot.slane %v281, %v285
      %v288 = vadd.f32 %v279, %v286
      %v289 = vadd.f32 %v280, %v286
      %v290 = vld [vmem:[%s0] sm:$0xff]
      %v291 = vld [vmem:[%s0 + $0x8] sm:$0xff]
      %v292 = vadd.f32 %v290, %v288
      %v293 = vadd.f32 %v291, %v289
      %294 = vst.msk [vmem:[#allocation4] sm:$0xff] %vm96, %v292
      %295 = vst.msk [vmem:[#allocation4 + $0x8] sm:$0xff] %vm96, %v293
    $region37: #{tpu_custom_call.1} parent=1 // pred_fallthru
      _
    // Predicated region
    $region38: #{tpu_custom_call.1} parent=1 // pred_check
      _
    $region39: #{tpu_custom_call.1} parent=1 // pred_check_branch
      %297 = sbr.rel (0) target = $region41
    $region40: #{tpu_custom_call.1} parent=1 // pred_region
      %s299 = ssub.s32 256, 256
      %300 = vsyncadd [#allocation5], %s299
      %s301 = sshll.u32 [#allocation4], 4
      %s302 = int_to_ptr.vmem [resolvable:$true] %s301
      %307 = dma.vmem_to_hbm [thread:$0]  %s302, 256, %s7, [#allocation5], 128, 128, 8
    $region41: #{tpu_custom_call.1} parent=1 // pred_fallthru
      _
    // Predicated region
    $region42: #{tpu_custom_call.1} parent=1 // pred_check
      _
    $region43: #{tpu_custom_call.1} parent=1 // pred_check_branch
      %309 = sbr.rel (0) target = $region45
    $region44: #{tpu_custom_call.1} parent=1 // pred_region
      %310 = dma.done [#allocation5], 256
    $region45: #{tpu_custom_call.1} parent=1 // pred_fallthru
      _
    %311 = vsyncpa [#allocation5], 1

// kernel: tpu_custom_call.1
$region0: #{tpu_custom_call.1}
  #allocation0 [shape = 'u32[]', space=smem, size = 0x4, offset = 0x4, fixed_abs, tag = 'smem constant byte address 0x4 - core index']
  #allocation1 [shape = 'u32[144,128]{1,0:T(1,128)}', space=vmem, size = 0x12000, scoped, tag = 'internal scratch']
  #allocation2 [shape = 'f32[16,32]{1,0:T(8,128)}', space=vmem, size = 0x2000, scoped, tag = 'scratch operand']
  #allocation3 [shape = 'f32[16,32]{1,0:T(8,128)}', space=vmem, size = 0x2000, scoped, tag = 'scratch operand']
  %s0 = inlined_call_operand.vmem [shape: f32[16,32], index: 0, kind: input, shape index: {}]
  %s1 = inlined_call_operand.vmem [shape: f32[1,32], index: 1, kind: input, shape index: {}]
  %s2 = inlined_call_operand.vmem [shape: f32[1,32], index: 2, kind: input, shape index: {}]
  %s3 = inlined_call_operand.vmem [shape: f32[32,64], index: 3, kind: input, shape index: {}]
  %s4 = inlined_call_operand.vmem [shape: f32[1,64], index: 4, kind: input, shape index: {}]
  %s5 = inlined_call_operand.vmem [shape: f32[64,32], index: 5, kind: input, shape index: {}]
  %s6 = inlined_call_operand.vmem [shape: f32[1,32], index: 6, kind: input, shape index: {}]
  %s7 = inlined_call_operand.hbm [shape: f32[16,32], index: 7, kind: output, shape index: {}]
  %s8 = sld [smem:[#allocation0]]
  $region46: #{tpu_custom_call.1} parent=0
    _
  %s10 = ssub.s32 1, %s8
  %s11 = scalar_select 0, %s10, %s8
  $region1: #{tpu_custom_call.1} parent=0
    #allocation4 [shape = 'u8[8192]{0}', space=vmem, size = 0x2000, scoped, tag = 'output window, operand 0, single buffered']
    #allocation5 [shape = 's32[1]{0}', space=sflag, size = 0x4, scoped, tag = 'scoped memory for tpu_custom_call.1']
    %12 = vsyncpa [#allocation5], 0
    // Predicated region
    $region2: #{tpu_custom_call.1} parent=1 // pred_check
      _
    $region3: #{tpu_custom_call.1} parent=1 // pred_check_branch
      %14 = sbr.rel (0) target = $region5
    $region4: #{tpu_custom_call.1} parent=1 // pred_region
      _
    $region5: #{tpu_custom_call.1} parent=1 // pred_fallthru
      _
    // Predicated region
    $region6: #{tpu_custom_call.1} parent=1 // pred_check
      _
    $region7: #{tpu_custom_call.1} parent=1 // pred_check_branch
      %16 = sbr.rel (0) target = $region9
    $region8: #{tpu_custom_call.1} parent=1 // pred_region
      _
    $region9: #{tpu_custom_call.1} parent=1 // pred_fallthru
      _
    // Predicated region
    $region10: #{tpu_custom_call.1} parent=1 // pred_check
      _
    $region11: #{tpu_custom_call.1} parent=1 // pred_check_branch
      %18 = sbr.rel (0) target = $region13
    $region12: #{tpu_custom_call.1} parent=1 // pred_region
      _
    $region13: #{tpu_custom_call.1} parent=1 // pred_fallthru
      _
    // Predicated region
    $region14: #{tpu_custom_call.1} parent=1 // pred_check
      _
    $region15: #{tpu_custom_call.1} parent=1 // pred_check_branch
      %20 = sbr.rel (0) target = $region17
    $region16: #{tpu_custom_call.1} parent=1 // pred_region
      _
    $region17: #{tpu_custom_call.1} parent=1 // pred_fallthru
      _
    // Predicated region
    $region18: #{tpu_custom_call.1} parent=1 // pred_check
      _
    $region19: #{tpu_custom_call.1} parent=1 // pred_check_branch
      %22 = sbr.rel (0) target = $region21
    $region20: #{tpu_custom_call.1} parent=1 // pred_region
      _
    $region21: #{tpu_custom_call.1} parent=1 // pred_fallthru
      _
    // Predicated region
    $region22: #{tpu_custom_call.1} parent=1 // pred_check
      _
    $region23: #{tpu_custom_call.1} parent=1 // pred_check_branch
      %24 = sbr.rel (0) target = $region25
    $region24: #{tpu_custom_call.1} parent=1 // pred_region
      _
    $region25: #{tpu_custom_call.1} parent=1 // pred_fallthru
      _
    // Predicated region
    $region26: #{tpu_custom_call.1} parent=1 // pred_check
      _
    $region27: #{tpu_custom_call.1} parent=1 // pred_check_branch
      %26 = sbr.rel (0) target = $region29
    $region28: #{tpu_custom_call.1} parent=1 // pred_region
      _
    $region29: #{tpu_custom_call.1} parent=1 // pred_fallthru
      _
    %p27 = scmp.eq.s32.totalorder 0, 0
    // Predicated region
    $region30: #{tpu_custom_call.1} parent=1 // pred_check
      %p28 = pneg %p27
    $region31: #{tpu_custom_call.1} parent=1 // pred_check_branch
      %30 = sbr.rel (%p28) target = $region33
    $region32: #{tpu_custom_call.1} parent=1 // pred_region
      %v31 = vld [vmem:[%s0] sm:$0xff]
      %v32 = vld [vmem:[%s0 + $0x8] sm:$0xff]
      %vm33 = vcmask 261120
      %v34 = vsel %vm33, %v31, 0.0
      %35 = vadd.xlane.f32.xlu0 %v34
      %v36 = vpop.xlane.xlu0 %35
      %v37 = vsel %vm33, %v32, 0.0
      %38 = vadd.xlane.f32.xlu0 %v37
      %v39 = vpop.xlane.xlu0 %38
      %v40 = vrcp.pop 32.0
      %v41 = vmul.f32 %v36, %v40
      %v42 = vmul.f32 %v39, %v40
      %v43 = vsub.f32 %v31, %v41
      %v44 = vsub.f32 %v32, %v42
      %v45 = vmul.f32 %v43, %v43
      %v46 = vmul.f32 %v44, %v44
      %v47 = vsel %vm33, %v45, 0.0
      %48 = vadd.xlane.f32.xlu0 %v47
      %v49 = vpop.xlane.xlu0 %48
      %v50 = vsel %vm33, %v46, 0.0
      %51 = vadd.xlane.f32.xlu0 %v50
      %v52 = vpop.xlane.xlu0 %51
      %v53 = vmul.f32 %v49, %v40
      %v54 = vmul.f32 %v52, %v40
      %v55 = vadd.f32 %v53, 1e-05
      %v56 = vadd.f32 %v54, 1e-05
      %v57 = vrsqrt.pop %v55
      %v58 = vrsqrt.pop %v56
      %v59 = vmul.f32 %v43, %v57
      %v60 = vmul.f32 %v44, %v58
      %v61 = vld [vmem:[%s1] sm:$0x1]
      %v63 = vlaneseq
      %v64 = vshrl.u32 %v63, 7
      %v65 = vsub.s32 0, %v64
      %v66 = vrot.slane %v61, %v65
      %v68 = vmul.f32 %v59, %v66
      %v69 = vmul.f32 %v60, %v66
      %v70 = vld [vmem:[%s2] sm:$0x1]
      %v72 = vlaneseq
      %v73 = vshrl.u32 %v72, 7
      %v74 = vsub.s32 0, %v73
      %v75 = vrot.slane %v70, %v74
      %v77 = vadd.f32 %v68, %v75
      %v78 = vadd.f32 %v69, %v75
      %79 = vst.msk [vmem:[#allocation2] sm:$0xff] %vm33, %v77
      %80 = vst.msk [vmem:[#allocation2 + $0x8] sm:$0xff] %vm33, %v78
      %81 = vst.msk [vmem:[#allocation3] sm:$0xff] %vm33, 0.0
      %82 = vst.msk [vmem:[#allocation3 + $0x8] sm:$0xff] %vm33, 0.0
    $region33: #{tpu_custom_call.1} parent=1 // pred_fallthru
      _
    %v83 = vld [vmem:[#allocation2] sm:$0xff]
    %v84 = vld [vmem:[#allocation2 + $0x8] sm:$0xff]
    %v85 = vld [vmem:[%s3] sm:$0xff]
    %v86 = vld [vmem:[%s3 + $0x8] sm:$0xff]
    %v87 = vld [vmem:[%s3 + $0x10] sm:$0xff]
    %v88 = vld [vmem:[%s3 + $0x18] sm:$0xff]
    %v89 = vld [vmem:[%s4] sm:$0x1]
    %v91 = vlaneseq
    %v92 = vshrl.u32 %v91, 7
    %v93 = vsub.s32 0, %v92
    %v94 = vrot.slane %v89, %v93
    %vm96 = vcmask 261120
    %v98 = vsel %vm96, %v83, 0
    %v101 = vsel %vm96, %v84, 0
    %103 = vmatprep.subr.mxu0 0.0
    %104 = vmatpush1.msra.mxu0 0.0
    %105 = vmatprep.subr.mxu0 0.0
    %106 = vmatpush1.msra.mxu0 0.0
    %107 = vmatprep.subr.mxu0 0.0
    %108 = vmatpush1.msra.mxu0 0.0
    %109 = vmatprep.subr.mxu0 0.0
    %110 = vmatpush1.msra.mxu0 0.0
    %111 = vmatprep.subr.mxu0 0.0
    %112 = vmatpush1.msra.mxu0 0.0
    %113 = vmatprep.subr.mxu0 0.0
    %114 = vmatpush1.msra.mxu0 0.0
    %115 = vmatprep.subr.mxu0 0.0
    %116 = vmatpush1.msra.mxu0 0.0
    %117 = vmatprep.subr.mxu0 0.0
    %118 = vmatpush1.msra.mxu0 0.0
    %119 = vmatprep.subr.mxu0 0.0
    %120 = vmatpush1.msra.mxu0 0.0
    %121 = vmatprep.subr.mxu0 0.0
    %122 = vmatpush1.msra.mxu0 0.0
    %123 = vmatprep.subr.mxu0 0.0
    %124 = vmatpush1.msra.mxu0 0.0
    %125 = vmatprep.subr.mxu0 0.0
    %126 = vmatpush1.msra.mxu0 0.0
    %127 = vmatprep.subr.mxu0 0.0
    %128 = vmatpush1.msra.mxu0 %v88
    %129 = vmatprep.subr.mxu0 0.0
    %130 = vmatpush1.msra.mxu0 %v87
    %131 = vmatprep.subr.mxu0 0.0
    %132 = vmatpush1.msra.mxu0 %v86
    %133 = vmatprep.subr.mxu0 0.0
    %134 = vmatpush1.msra.mxu0 %v85
    %135 = vmatprep.subr.mxu0 0.0
    %136 = vmatpush2.msra.mxu0 0.0
    %137 = vmatprep.subr.mxu0 0.0
    %138 = vmatpush2.msra.mxu0 0.0
    %139 = vmatprep.subr.mxu0 0.0
    %140 = vmatpush2.msra.mxu0 0.0
    %141 = vmatprep.subr.mxu0 0.0
    %142 = vmatpush2.msra.mxu0 0.0
    %143 = vmatprep.subr.mxu0 0.0
    %144 = vmatpush2.msra.mxu0 0.0
    %145 = vmatprep.subr.mxu0 0.0
    %146 = vmatpush2.msra.mxu0 0.0
    %147 = vmatprep.subr.mxu0 0.0
    %148 = vmatpush2.msra.mxu0 0.0
    %149 = vmatprep.subr.mxu0 0.0
    %150 = vmatpush2.msra.mxu0 0.0
    %151 = vmatprep.subr.mxu0 0.0
    %152 = vmatpush2.msra.mxu0 0.0
    %153 = vmatprep.subr.mxu0 0.0
    %154 = vmatpush2.msra.mxu0 0.0
    %155 = vmatprep.subr.mxu0 0.0
    %156 = vmatpush2.msra.mxu0 0.0
    %157 = vmatprep.subr.mxu0 0.0
    %158 = vmatpush2.msra.mxu0 0.0
    %159 = vmatprep.subr.mxu0 0.0
    %160 = vmatpush2.msra.mxu0 0.0
    %161 = vmatprep.subr.mxu0 0.0
    %162 = vmatpush2.msra.mxu0 0.0
    %163 = vmatprep.subr.mxu0 0.0
    %164 = vmatpush2.msra.mxu0 0.0
    %165 = vmatprep.subr.mxu0 0.0
    %166 = vmatpush2.msra.mxu0 0.0
    %167 = vmatprep.mubr.f32.mxu0 0.0
    %168 = vmatmul.mubr.f32.gmra.mxu0 %v98
    %v169 = vpop.f32.mrf.mxu0
    %v170 = vadd.f32 %v94, %v169
    %v171 = vpop.f32.mrf.mxu0
    %172 = vmatprep.mubr.f32.mxu0 0.0
    %173 = vmatmul.mubr.f32.gmra.mxu0 %v101
    %v174 = vpop.f32.mrf.mxu0
    %v175 = vadd.f32 %v94, %v174
    %v176 = vpop.f32.mrf.mxu0
    %177 = vdwg.mxu0
    %v178 = vmax.f32 %v170, 0.0
    %v179 = vmax.f32 %v175, 0.0
    %v180 = vld [vmem:[#allocation3] sm:$0xff]
    %v181 = vld [vmem:[#allocation3 + $0x8] sm:$0xff]
    %v182 = vld [vmem:[%s5] sm:$0xff]
    %v183 = vld [vmem:[%s5 + $0x8] sm:$0xff]
    %v184 = vld [vmem:[%s5 + $0x10] sm:$0xff]
    %v185 = vld [vmem:[%s5 + $0x18] sm:$0xff]
    %v186 = vld [vmem:[%s5 + $0x20] sm:$0xff]
    %v187 = vld [vmem:[%s5 + $0x28] sm:$0xff]
    %v188 = vld [vmem:[%s5 + $0x30] sm:$0xff]
    %v189 = vld [vmem:[%s5 + $0x38] sm:$0xff]
    %vm190 = vcmask 523264
    %v192 = vsel %vm190, %v178, 0
    %v195 = vsel %vm190, %v179, 0
    %197 = vmatprep.subr.mxu0 0.0
    %198 = vmatpush1.msra.mxu0 0.0
    %199 = vmatprep.subr.mxu0 0.0
    %200 = vmatpush1.msra.mxu0 0.0
    %201 = vmatprep.subr.mxu0 0.0
    %202 = vmatpush1.msra.mxu0 0.0
    %203 = vmatprep.subr.mxu0 0.0
    %204 = vmatpush1.msra.mxu0 0.0
    %205 = vmatprep.subr.mxu0 0.0
    %206 = vmatpush1.msra.mxu0 0.0
    %207 = vmatprep.subr.mxu0 0.0
    %208 = vmatpush1.msra.mxu0 0.0
    %209 = vmatprep.subr.mxu0 0.0
    %210 = vmatpush1.msra.mxu0 0.0
    %211 = vmatprep.subr.mxu0 0.0
    %212 = vmatpush1.msra.mxu0 0.0
    %213 = vmatprep.subr.mxu0 0.0
    %214 = vmatpush1.msra.mxu0 %v189
    %215 = vmatprep.subr.mxu0 0.0
    %216 = vmatpush1.msra.mxu0 %v188
    %217 = vmatprep.subr.mxu0 0.0
    %218 = vmatpush1.msra.mxu0 %v187
    %219 = vmatprep.subr.mxu0 0.0
    %220 = vmatpush1.msra.mxu0 %v186
    %221 = vmatprep.subr.mxu0 0.0
    %222 = vmatpush1.msra.mxu0 %v185
    %223 = vmatprep.subr.mxu0 0.0
    %224 = vmatpush1.msra.mxu0 %v184
    %225 = vmatprep.subr.mxu0 0.0
    %226 = vmatpush1.msra.mxu0 %v183
    %227 = vmatprep.subr.mxu0 0.0
    %228 = vmatpush1.msra.mxu0 %v182
    %229 = vmatprep.subr.mxu0 0.0
    %230 = vmatpush2.msra.mxu0 0.0
    %231 = vmatprep.subr.mxu0 0.0
    %232 = vmatpush2.msra.mxu0 0.0
    %233 = vmatprep.subr.mxu0 0.0
    %234 = vmatpush2.msra.mxu0 0.0
    %235 = vmatprep.subr.mxu0 0.0
    %236 = vmatpush2.msra.mxu0 0.0
    %237 = vmatprep.subr.mxu0 0.0
    %238 = vmatpush2.msra.mxu0 0.0
    %239 = vmatprep.subr.mxu0 0.0
    %240 = vmatpush2.msra.mxu0 0.0
    %241 = vmatprep.subr.mxu0 0.0
    %242 = vmatpush2.msra.mxu0 0.0
    %243 = vmatprep.subr.mxu0 0.0
    %244 = vmatpush2.msra.mxu0 0.0
    %245 = vmatprep.subr.mxu0 0.0
    %246 = vmatpush2.msra.mxu0 0.0
    %247 = vmatprep.subr.mxu0 0.0
    %248 = vmatpush2.msra.mxu0 0.0
    %249 = vmatprep.subr.mxu0 0.0
    %250 = vmatpush2.msra.mxu0 0.0
    %251 = vmatprep.subr.mxu0 0.0
    %252 = vmatpush2.msra.mxu0 0.0
    %253 = vmatprep.subr.mxu0 0.0
    %254 = vmatpush2.msra.mxu0 0.0
    %255 = vmatprep.subr.mxu0 0.0
    %256 = vmatpush2.msra.mxu0 0.0
    %257 = vmatprep.subr.mxu0 0.0
    %258 = vmatpush2.msra.mxu0 0.0
    %259 = vmatprep.subr.mxu0 0.0
    %260 = vmatpush2.msra.mxu0 0.0
    %261 = vmatprep.mubr.f32.mxu0 0.0
    %262 = vmatmul.mubr.f32.gmra.mxu0 %v192
    %v263 = vpop.f32.mrf.mxu0
    %v264 = vadd.f32 0.0, %v263
    %v265 = vpop.f32.mrf.mxu0
    %266 = vmatprep.mubr.f32.mxu0 0.0
    %267 = vmatmul.mubr.f32.gmra.mxu0 %v195
    %v268 = vpop.f32.mrf.mxu0
    %v269 = vadd.f32 0.0, %v268
    %v270 = vpop.f32.mrf.mxu0
    %271 = vdwg.mxu0
    %v272 = vadd.f32 %v180, %v264
    %v273 = vadd.f32 %v181, %v269
    %274 = vst.msk [vmem:[#allocation3] sm:$0xff] %vm96, %v272
    %275 = vst.msk [vmem:[#allocation3 + $0x8] sm:$0xff] %vm96, %v273
    // Predicated region
    $region34: #{tpu_custom_call.1} parent=1 // pred_check
      %p276 = pneg %p27
    $region35: #{tpu_custom_call.1} parent=1 // pred_check_branch
      %278 = sbr.rel (%p276) target = $region37
    $region36: #{tpu_custom_call.1} parent=1 // pred_region
      %v279 = vld [vmem:[#allocation3] sm:$0xff]
      %v280 = vld [vmem:[#allocation3 + $0x8] sm:$0xff]
      %v281 = vld [vmem:[%s6] sm:$0x1]
      %v283 = vlaneseq
      %v284 = vshrl.u32 %v283, 7
      %v285 = vsub.s32 0, %v284
      %v286 = vrot.slane %v281, %v285
      %v288 = vadd.f32 %v279, %v286
      %v289 = vadd.f32 %v280, %v286
      %v290 = vld [vmem:[%s0] sm:$0xff]
      %v291 = vld [vmem:[%s0 + $0x8] sm:$0xff]
      %v292 = vadd.f32 %v290, %v288
      %v293 = vadd.f32 %v291, %v289
      %294 = vst.msk [vmem:[#allocation4] sm:$0xff] %vm96, %v292
      %295 = vst.msk [vmem:[#allocation4 + $0x8] sm:$0xff] %vm96, %v293
    $region37: #{tpu_custom_call.1} parent=1 // pred_fallthru
      _
    // Predicated region
    $region38: #{tpu_custom_call.1} parent=1 // pred_check
      _
    $region39: #{tpu_custom_call.1} parent=1 // pred_check_branch
      %297 = sbr.rel (0) target = $region41
    $region40: #{tpu_custom_call.1} parent=1 // pred_region
      %s299 = ssub.s32 256, 256
      %300 = vsyncadd [#allocation5], %s299
      %s301 = sshll.u32 [#allocation4], 4
      %s302 = int_to_ptr.vmem [resolvable:$true] %s301
      %307 = dma.vmem_to_hbm [thread:$0]  %s302, 256, %s7, [#allocation5], 128, 128, 8
    $region41: #{tpu_custom_call.1} parent=1 // pred_fallthru
      _
    // Predicated region
    $region42: #{tpu_custom_call.1} parent=1 // pred_check
      _
    $region43: #{tpu_custom_call.1} parent=1 // pred_check_branch
      %309 = sbr.rel (0) target = $region45
    $region44: #{tpu_custom_call.1} parent=1 // pred_region
      %310 = dma.done [#allocation5], 256
    $region45: #{tpu_custom_call.1} parent=1 // pred_fallthru
      _
    %311 = vsyncpa [#allocation5], 1

</llo_original>
